<compile_context>
chip_gen: v5e
topology: v5e:2x2
jax: 0.10.0
libtpu: 0.0.40
codegen_flags: <defaults>
</compile_context>

<pallas_src>
import jax
import jax.numpy as jnp
from jax.experimental import pallas as pl
from jax.experimental.pallas import tpu as pltpu


# ----------------------------------------------------------------------------
# Fused attention-gate Pallas kernel (channels on sublanes, spatial on lanes)
# ----------------------------------------------------------------------------
def _attention_gate_kernel(x_ref, g_ref, wg_ref, wx_ref, bint_ref,
                           wp_ref, bpsi_ref, o_ref):
    # x_ref:   (F_l,   thw) f32   skip connection (also used for final mul)
    # g_ref:   (F_g,   thw) f32   gating signal
    # wg_ref:  (Fi_p,  F_g) bf16  BN-folded W_g, transposed, F_int padded to 8
    # wx_ref:  (Fi_p,  F_l) bf16  BN-folded W_x, transposed
    # bint_ref:(Fi_p,  1)   f32   folded bias of W_g + W_x (per sublane)
    # wp_ref:  (Fi_p,  1)   f32   psi weight column
    # bpsi_ref:(1,     1)   f32   psi folded bias
    # o_ref:   (F_l,   thw) f32
    x = x_ref[...]                                           # f32, read once

    g1 = jnp.dot(wg_ref[...], g_ref[...].astype(jnp.bfloat16),
                 preferred_element_type=jnp.float32)          # (Fi_p, thw)
    x1 = jnp.dot(wx_ref[...], x.astype(jnp.bfloat16),
                 preferred_element_type=jnp.float32)          # (Fi_p, thw)
    a = jnp.maximum(g1 + x1 + bint_ref[...], 0.0)             # relu, f32

    # psi conv has a single output channel: F_int-long accumulation over
    # sublanes in f32 (VPU mul + sublane reduce), no MXU / replicated weight.
    s = jnp.sum(a * wp_ref[...], axis=0, keepdims=True)       # (1, thw) f32
    psi = jax.nn.sigmoid(s + bpsi_ref[...])                   # (1, thw) f32

    # Broadcast psi over the F_l sublanes of x.
    o_ref[...] = (x * psi).astype(o_ref.dtype)


def _round_up(v, m):
    return ((v + m - 1) // m) * m


_THW_CAP = 8192  # lanes per spatial block; ~1.5 MiB of f32 blocks -> fits all gens


def _spatial_tiling(hw):
    """Return (spatial tile, padded HW). Prefer no padding at all."""
    if hw <= _THW_CAP:
        return hw, hw                      # single block / sample, no padding
    t = _THW_CAP - (_THW_CAP % 128)
    while t >= 128:                        # largest lane-aligned divisor
        if hw % t == 0:
            return t, hw
        t -= 128
    # Rare fallback: pad the spatial axis (small relative overhead).
    t = 2048
    return t, _round_up(hw, t)


def attention_gate(x_nchw, g_nchw, prep):
    """PyTorch-layout entry point: x,g NCHW -> out NCHW (same shape as x)."""
    N, Fl, H, W = x_nchw.shape
    Fg = g_nchw.shape[1]
    HW = H * W
    Fi_p = prep["Fi_pad"]

    # Free reshapes: NCHW -> (N, C, H*W). No transpose, no channel padding.
    x3 = x_nchw.reshape(N, Fl, HW)
    g3 = g_nchw.reshape(N, Fg, HW)

    thw, HWp = _spatial_tiling(HW)
    if HWp != HW:  # rare fallback path only
        x3 = jnp.pad(x3, ((0, 0), (0, 0), (0, HWp - HW)))
        g3 = jnp.pad(g3, ((0, 0), (0, 0), (0, HWp - HW)))

    grid = (N, HWp // thw)

    cost = pl.CostEstimate(
        flops=int(2 * N * HWp * Fi_p * (Fg + Fl + 1)),
        transcendentals=int(N * HWp),
        bytes_accessed=int(4 * N * HWp * (2 * Fl + Fg)),
    )

    out = pl.pallas_call(
        _attention_gate_kernel,
        out_shape=jax.ShapeDtypeStruct((N, Fl, HWp), jnp.float32),
        grid_spec=pltpu.PrefetchScalarGridSpec(
            num_scalar_prefetch=0,
            grid=grid,
            in_specs=[
                pl.BlockSpec((pl.Squeezed(), Fl, thw), lambda n, s: (n, 0, s)),  # x
                pl.BlockSpec((pl.Squeezed(), Fg, thw), lambda n, s: (n, 0, s)),  # g
                pl.BlockSpec((Fi_p, Fg), lambda n, s: (0, 0)),   # W_g^T (resident)
                pl.BlockSpec((Fi_p, Fl), lambda n, s: (0, 0)),   # W_x^T (resident)
                pl.BlockSpec((Fi_p, 1), lambda n, s: (0, 0)),    # b_g + b_x
                pl.BlockSpec((Fi_p, 1), lambda n, s: (0, 0)),    # psi weight col
                pl.BlockSpec((1, 1), lambda n, s: (0, 0)),       # psi bias
            ],
            out_specs=pl.BlockSpec((pl.Squeezed(), Fl, thw),
                                   lambda n, s: (n, 0, s)),
        ),
        compiler_params=pltpu.CompilerParams(
            dimension_semantics=("parallel", "parallel")),
        cost_estimate=cost,
    )(x3, g3, prep["wg_t"], prep["wx_t"], prep["b_int"],
      prep["wp_col"], prep["b_psi"])

    if HWp != HW:
        out = out[:, :, :HW]
    return out.reshape(N, Fl, H, W)        # free reshape back to NCHW


# ----------------------------------------------------------------------------
# Deterministic synthetic parameters + eval-mode BN folding (done once)
# ----------------------------------------------------------------------------
class ParamGen:
    def __init__(self, key):
        self.key = key

    def _next(self):
        self.key, k = jax.random.split(self.key)
        return k

    def conv1x1(self, cin, cout):
        w = jax.random.normal(self._next(), (cin, cout),
                              jnp.float32) * (1.0 / cin) ** 0.5
        b = 0.01 * jax.random.normal(self._next(), (cout,), jnp.float32)
        return w, b

    def bn(self, c):
        gamma = 1.0 + 0.1 * jax.random.normal(self._next(), (c,), jnp.float32)
        beta = 0.1 * jax.random.normal(self._next(), (c,), jnp.float32)
        mean = 0.1 * jax.random.normal(self._next(), (c,), jnp.float32)
        var = 1.0 + 0.1 * jax.random.uniform(self._next(), (c,), jnp.float32)
        return gamma, beta, mean, var


def fold_bn(w, b, bn, eps=1e-5):
    gamma, beta, mean, var = bn
    scale = gamma / jnp.sqrt(var + eps)
    return w * scale[None, :], (b - mean) * scale + beta


def init_attention_gate_params(key, F_l, F_g, F_int):
    pg = ParamGen(key)
    return {
        "W_g": (*pg.conv1x1(F_g, F_int), pg.bn(F_int)),
        "W_x": (*pg.conv1x1(F_l, F_int), pg.bn(F_int)),
        "psi": (*pg.conv1x1(F_int, 1), pg.bn(1)),
    }


def prepare_params(params, F_l, F_g, F_int):
    """BN-fold, transpose to (F_int, Cin), pad F_int to 8 sublanes, bf16 — ONCE."""
    Fi_pad = _round_up(F_int, 8)
    pad_i = Fi_pad - F_int

    wg, bg = fold_bn(*params["W_g"])          # (F_g, F_int), (F_int,)
    wx, bx = fold_bn(*params["W_x"])          # (F_l, F_int), (F_int,)
    wp, bp = fold_bn(*params["psi"])          # (F_int, 1),   (1,)

    wg_t = jnp.pad(wg.T, ((0, pad_i), (0, 0))).astype(jnp.bfloat16)   # (Fi_p, F_g)
    wx_t = jnp.pad(wx.T, ((0, pad_i), (0, 0))).astype(jnp.bfloat16)   # (Fi_p, F_l)
    b_int = jnp.pad(bg + bx, (0, pad_i)).reshape(Fi_pad, 1).astype(jnp.float32)
    wp_col = jnp.pad(wp[:, 0], (0, pad_i)).reshape(Fi_pad, 1).astype(jnp.float32)
    b_psi = jnp.reshape(bp, (1, 1)).astype(jnp.float32)

    return dict(wg_t=wg_t, wx_t=wx_t, b_int=b_int,
                wp_col=wp_col, b_psi=b_psi, Fi_pad=Fi_pad)


# ----------------------------------------------------------------------------
# Pure-JAX reference (f32) for correctness check
# ----------------------------------------------------------------------------
def attention_gate_ref(x_nchw, g_nchw, params):
    N, Fl, H, W = x_nchw.shape
    Fg = g_nchw.shape[1]
    x_m = jnp.transpose(x_nchw, (0, 2, 3, 1)).reshape(N * H * W, Fl)
    g_m = jnp.transpose(g_nchw, (0, 2, 3, 1)).reshape(N * H * W, Fg)
    wg, bg = fold_bn(*params["W_g"])
    wx, bx = fold_bn(*params["W_x"])
    wp, bp = fold_bn(*params["psi"])
    a = jnp.maximum(g_m @ wg + bg + x_m @ wx + bx, 0.0)
    psi = jax.nn.sigmoid(a @ wp + bp)            # [M, 1]
    out = x_m * psi
    return jnp.transpose(out.reshape(N, H, W, Fl), (0, 3, 1, 2))


if __name__ == "__main__":
    key = jax.random.PRNGKey(0)
    k_params, k_x, k_g = jax.random.split(key, 3)

    # Small shapes consistent with the module: F_l = skip ch, F_g = gate ch,
    # F_int = F_l // 2, same spatial size for x and g.
    N, F_l, F_g, F_int, H, W = 2, 8, 16, 4, 16, 16

    params = init_attention_gate_params(k_params, F_l, F_g, F_int)
    prep = prepare_params(params, F_l, F_g, F_int)

    x = jax.random.normal(k_x, (N, F_l, H, W), jnp.float32)
    g = jax.random.normal(k_g, (N, F_g, H, W), jnp.float32)

    out = jax.block_until_ready(attention_gate(x, g, prep))

    assert out.shape == x.shape, out.shape
    assert bool(jnp.isfinite(out).all())

    ref = attention_gate_ref(x, g, params)
    assert bool(jnp.allclose(out, ref, atol=5e-2, rtol=5e-2)), (
        float(jnp.abs(out - ref).max()))

    print("KERNEL_OK")
</pallas_src>

<mosaic_0001>
module attributes {stable_mosaic.version = 11 : i64} {
  func.func @_attention_gate_kernel(%arg0: i32, %arg1: i32, %arg2: memref<1x8x256xf32, #tpu.memory_space<vmem>>, %arg3: memref<1x16x256xf32, #tpu.memory_space<vmem>>, %arg4: memref<8x16xbf16, #tpu.memory_space<vmem>>, %arg5: memref<8x8xbf16, #tpu.memory_space<vmem>>, %arg6: memref<8x1xf32, #tpu.memory_space<vmem>>, %arg7: memref<8x1xf32, #tpu.memory_space<vmem>>, %arg8: memref<1x1xf32, #tpu.memory_space<vmem>>, %arg9: memref<1x8x256xf32, #tpu.memory_space<vmem>>) attributes {dimension_semantics = [#tpu.dimension_semantics<parallel>, #tpu.dimension_semantics<parallel>], iteration_bounds = array<i64: 2, 1>, scalar_prefetch = 0 : i64, scratch_operands = 0 : i64, tpu.core_type = #tpu.core_type<tc>, window_params = [{transform_indices = @transform_0, window_bounds = array<i64: 1, 8, 256>}, {transform_indices = @transform_1, window_bounds = array<i64: 1, 16, 256>}, {pipeline_mode = #tpu.pipeline_mode<synchronous>, transform_indices = @transform_2, window_bounds = array<i64: 8, 16>}, {pipeline_mode = #tpu.pipeline_mode<synchronous>, transform_indices = @transform_3, window_bounds = array<i64: 8, 8>}, {pipeline_mode = #tpu.pipeline_mode<synchronous>, transform_indices = @transform_4, window_bounds = array<i64: 8, 1>}, {pipeline_mode = #tpu.pipeline_mode<synchronous>, transform_indices = @transform_5, window_bounds = array<i64: 8, 1>}, {pipeline_mode = #tpu.pipeline_mode<synchronous>, transform_indices = @transform_6, window_bounds = array<i64: 1, 1>}, {transform_indices = @transform_7, window_bounds = array<i64: 1, 8, 256>}]} {
    %c0 = arith.constant 0 : index
    %c0_0 = arith.constant 0 : index
    %c0_1 = arith.constant 0 : index
    %0 = vector.load %arg2[%c0, %c0_0, %c0_1] : memref<1x8x256xf32, #tpu.memory_space<vmem>>, vector<1x8x256xf32>
    %1 = vector.shape_cast %0 : vector<1x8x256xf32> to vector<8x256xf32>
    %c0_2 = arith.constant 0 : index
    %c0_3 = arith.constant 0 : index
    %2 = vector.load %arg4[%c0_2, %c0_3] : memref<8x16xbf16, #tpu.memory_space<vmem>>, vector<8x16xbf16>
    %c0_4 = arith.constant 0 : index
    %c0_5 = arith.constant 0 : index
    %c0_6 = arith.constant 0 : index
    %3 = vector.load %arg3[%c0_4, %c0_5, %c0_6] : memref<1x16x256xf32, #tpu.memory_space<vmem>>, vector<1x16x256xf32>
    %4 = vector.shape_cast %3 : vector<1x16x256xf32> to vector<16x256xf32>
    %5 = arith.truncf %4 : vector<16x256xf32> to vector<16x256xbf16>
    %cst = arith.constant dense<0.000000e+00> : vector<8x256xf32>
    %6 = tpu.matmul %2, %5, %cst {dimension_numbers = #tpu.dot_dimension_numbers<[1], [0], [0], [1], [0, 0, 1, 1], [], []>} : vector<8x16xbf16>, vector<16x256xbf16>, vector<8x256xf32> -> vector<8x256xf32>
    %c0_7 = arith.constant 0 : index
    %c0_8 = arith.constant 0 : index
    %7 = vector.load %arg5[%c0_7, %c0_8] : memref<8x8xbf16, #tpu.memory_space<vmem>>, vector<8x8xbf16>
    %8 = arith.truncf %1 : vector<8x256xf32> to vector<8x256xbf16>
    %cst_9 = arith.constant dense<0.000000e+00> : vector<8x256xf32>
    %9 = tpu.matmul %7, %8, %cst_9 {dimension_numbers = #tpu.dot_dimension_numbers<[1], [0], [0], [1], [0, 0, 1, 1], [], []>} : vector<8x8xbf16>, vector<8x256xbf16>, vector<8x256xf32> -> vector<8x256xf32>
    %10 = arith.addf %6, %9 : vector<8x256xf32>
    %c0_10 = arith.constant 0 : index
    %c0_11 = arith.constant 0 : index
    %11 = vector.load %arg6[%c0_10, %c0_11] : memref<8x1xf32, #tpu.memory_space<vmem>>, vector<8x1xf32>
    %12 = vector.broadcast %11 : vector<8x1xf32> to vector<8x256xf32>
    %13 = arith.addf %10, %12 : vector<8x256xf32>
    %cst_12 = arith.constant 0.000000e+00 : f32
    %14 = vector.broadcast %cst_12 : f32 to vector<8x256xf32>
    %15 = arith.maximumf %13, %14 : vector<8x256xf32>
    %c0_13 = arith.constant 0 : index
    %c0_14 = arith.constant 0 : index
    %16 = vector.load %arg7[%c0_13, %c0_14] : memref<8x1xf32, #tpu.memory_space<vmem>>, vector<8x1xf32>
    %17 = vector.broadcast %16 : vector<8x1xf32> to vector<8x256xf32>
    %18 = arith.mulf %15, %17 : vector<8x256xf32>
    %cst_15 = arith.constant dense<0.000000e+00> : vector<256xf32>
    %19 = vector.multi_reduction <add>, %18, %cst_15 [0] : vector<8x256xf32> to vector<256xf32>
    %20 = vector.shape_cast %19 : vector<256xf32> to vector<1x256xf32>
    %c0_16 = arith.constant 0 : index
    %c0_17 = arith.constant 0 : index
    %21 = vector.load %arg8[%c0_16, %c0_17] : memref<1x1xf32, #tpu.memory_space<vmem>>, vector<1x1xf32>
    %22 = vector.broadcast %21 : vector<1x1xf32> to vector<1x256xf32>
    %23 = arith.addf %20, %22 : vector<1x256xf32>
    %24 = arith.negf %23 : vector<1x256xf32>
    %25 = math.exp %24 : vector<1x256xf32>
    %cst_18 = arith.constant 1.000000e+00 : f32
    %26 = vector.broadcast %cst_18 : f32 to vector<1x256xf32>
    %27 = arith.addf %26, %25 : vector<1x256xf32>
    %28 = arith.divf %26, %27 : vector<1x256xf32>
    %29 = vector.broadcast %28 : vector<1x256xf32> to vector<8x256xf32>
    %30 = arith.mulf %1, %29 : vector<8x256xf32>
    %c0_19 = arith.constant 0 : index
    %c0_20 = arith.constant 0 : index
    %c0_21 = arith.constant 0 : index
    %31 = vector.load %arg9[%c0_19, %c0_20, %c0_21] : memref<1x8x256xf32, #tpu.memory_space<vmem>>, vector<1x8x256xf32>
    %32 = vector.shape_cast %31 : vector<1x8x256xf32> to vector<8x256xf32>
    %33 = vector.shape_cast %30 : vector<8x256xf32> to vector<1x8x256xf32>
    tpu.vector_store %arg9[%c0_19, %c0_20, %c0_21], %33 {strides = array<i32>} : memref<1x8x256xf32, #tpu.memory_space<vmem>>, vector<1x8x256xf32>,
    return
  }
  func.func @transform_0(%arg0: i32, %arg1: i32) -> (i32, i32, i32) {
    %c0_i32 = arith.constant 0 : i32
    %c0_i32_0 = arith.constant 0 : i32
    return %arg0, %c0_i32, %arg1 : i32, i32, i32
  }
  func.func @transform_1(%arg0: i32, %arg1: i32) -> (i32, i32, i32) {
    %c0_i32 = arith.constant 0 : i32
    %c0_i32_0 = arith.constant 0 : i32
    return %arg0, %c0_i32, %arg1 : i32, i32, i32
  }
  func.func @transform_2(%arg0: i32, %arg1: i32) -> (i32, i32) {
    %c0_i32 = arith.constant 0 : i32
    %c0_i32_0 = arith.constant 0 : i32
    %c0_i32_1 = arith.constant 0 : i32
    return %c0_i32, %c0_i32_0 : i32, i32
  }
  func.func @transform_3(%arg0: i32, %arg1: i32) -> (i32, i32) {
    %c0_i32 = arith.constant 0 : i32
    %c0_i32_0 = arith.constant 0 : i32
    %c0_i32_1 = arith.constant 0 : i32
    return %c0_i32, %c0_i32_0 : i32, i32
  }
  func.func @transform_4(%arg0: i32, %arg1: i32) -> (i32, i32) {
    %c0_i32 = arith.constant 0 : i32
    %c0_i32_0 = arith.constant 0 : i32
    %c0_i32_1 = arith.constant 0 : i32
    return %c0_i32, %c0_i32_0 : i32, i32
  }
  func.func @transform_5(%arg0: i32, %arg1: i32) -> (i32, i32) {
    %c0_i32 = arith.constant 0 : i32
    %c0_i32_0 = arith.constant 0 : i32
    %c0_i32_1 = arith.constant 0 : i32
    return %c0_i32, %c0_i32_0 : i32, i32
  }
  func.func @transform_6(%arg0: i32, %arg1: i32) -> (i32, i32) {
    %c0_i32 = arith.constant 0 : i32
    %c0_i32_0 = arith.constant 0 : i32
    %c0_i32_1 = arith.constant 0 : i32
    return %c0_i32, %c0_i32_0 : i32, i32
  }
  func.func @transform_7(%arg0: i32, %arg1: i32) -> (i32, i32, i32) {
    %c0_i32 = arith.constant 0 : i32
    %c0_i32_0 = arith.constant 0 : i32
    return %arg0, %c0_i32, %arg1 : i32, i32, i32
  }
}

</mosaic_0001>

<llo_original>
// kernel: tpu_custom_call.1
$region0: #{tpu_custom_call.1}
  #allocation0 [shape = 'u32[]', space=smem, size = 0x4, offset = 0x4, fixed_abs, tag = 'smem constant byte address 0x4 - core index']
  #allocation1 [shape = 'u32[72,128]{1,0:T(1,128)}', space=vmem, size = 0x9000, scoped, tag = 'internal scratch']
  #allocation2 [shape = 'f32[1,1]{1,0:T(1,128)S(1)}', space=vmem, size = 0x200, scoped, tag = 'scoped memory for tpu_custom_call.1']
  %s0 = inlined_call_operand.hbm [shape: f32[2,8,256], index: 0, kind: input, shape index: {}]
  %s1 = inlined_call_operand.hbm [shape: f32[2,16,256], index: 1, kind: input, shape index: {}]
  %s2 = inlined_call_operand.vmem [shape: bf16[8,16], index: 2, kind: input, shape index: {}]
  %s3 = inlined_call_operand.vmem [shape: bf16[8,8], index: 3, kind: input, shape index: {}]
  %s4 = inlined_call_operand.vmem [shape: f32[8,1], index: 4, kind: input, shape index: {}]
  %s5 = inlined_call_operand.vmem [shape: f32[8,1], index: 5, kind: input, shape index: {}]
  %s6 = inlined_call_operand.<no memory space> [shape: f32[1,1], index: 6, kind: input, shape index: {}]
  %s7 = inlined_call_operand.hbm [shape: f32[2,8,256], index: 7, kind: output, shape index: {}]
  %s8 = sld [smem:[#allocation0]]
  $region69: #{tpu_custom_call.1} parent=0
    _
  %s10 = ssub.s32 1, %s8
  %s11 = scalar_select 0, %s10, %s8
  %v12 = vstv %s6
  %13 = vst [vmem:[#allocation2] sm:$0x1] %v12
  $region1: #{tpu_custom_call.1} parent=0
    #allocation3 [shape = 'u8[16384]{0}', space=vmem, size = 0x4000, scoped, tag = 'input window, operand 0']
    #allocation4 [shape = 's32[2]{0}', space=sflag, size = 0x8, scoped, tag = 'scoped memory for tpu_custom_call.1']
    #allocation5 [shape = 's32[2]{0}', space=sflag, size = 0x8, scoped, tag = 'scoped memory for tpu_custom_call.1']
    #allocation6 [shape = 'u8[32768]{0}', space=vmem, size = 0x8000, scoped, tag = 'input window, operand 1']
    #allocation7 [shape = 's32[2]{0}', space=sflag, size = 0x8, scoped, tag = 'scoped memory for tpu_custom_call.1']
    #allocation8 [shape = 'u8[16384]{0}', space=vmem, size = 0x4000, scoped, tag = 'output window, operand 0']
    %14 = vsyncpa [#allocation4], 0
    %s15 = scalar_lea.sflag [#allocation4], 1
    %16 = vsyncpa %s15, 0
    %17 = vsyncpa [#allocation7], 0
    %s18 = scalar_lea.sflag [#allocation7], 1
    %19 = vsyncpa %s18, 0
    %20 = vsyncpa [#allocation5], 0
    %s21 = scalar_lea.sflag [#allocation5], 1
    %22 = vsyncpa %s21, 0
    loop: start=0, step=1, limit=4
    $region2: #{tpu_custom_call.1} parent=1 // loop_pre_header
      _
    $region3: #{tpu_custom_call.1} parent=1 // loop_header
      %s24 = sphi 0, %s28
      %p25 = scmp.ge.s32.totalorder %s24, 4
      %s31 = sphi 0, %s43
      %s32 = sphi 0, %s39
      %s33 = sphi 0, %s31
      %s34 = sphi 0, %s32
      %s35 = sphi 0, %s33
      %s36 = sphi 0, %s34
      %s48 = sphi 0, %s50
      %s51 = sphi 0, %s48
      %s52 = sphi 0, %s51
      %s68 = sphi 0, %s52
      %s76 = sphi 0, %s78
      %s79 = sphi 0, %s76
      %s80 = sphi 0, %s79
      %s96 = sphi 0, %s80
      %s100 = sphi 0, %s100
      %s102 = sphi 0, %s100
      %s103 = sphi 0, %s102
      %s117 = sphi 0, %s103
      %s121 = sphi 0, %s121
      %s123 = sphi 0, %s121
      %s124 = sphi 0, %s123
      %s138 = sphi 0, %s124
      %s142 = sphi 0, %s142
      %s144 = sphi 0, %s142
      %s145 = sphi 0, %s144
      %s159 = sphi 0, %s145
      %s163 = sphi 0, %s163
      %s165 = sphi 0, %s163
      %s166 = sphi 0, %s165
      %s180 = sphi 0, %s166
      %s184 = sphi 0, %s184
      %s186 = sphi 0, %s184
      %s187 = sphi 0, %s186
      %s201 = sphi 0, %s187
      %s209 = sphi 0, %s211
      %s212 = sphi 0, %s209
      %s213 = sphi 0, %s212
      %s229 = sphi 0, %s213
    $region4: #{tpu_custom_call.1} parent=1 // loop_header_branch
      %27 = sbr.rel (%p25) target = $region8
    $region5: #{tpu_custom_call.1} parent=1 // loop_body
      %s29 = ssub.s32 %s24, 1
      %s30 = ssub.s32 %s24, 2
      %s37 = sadd.s32 1, %s32
      %p38 = scmp.ge.s32.totalorder %s37, 1
      %s39 = scalar_select %p38, 0, %s37
      %s40 = sadd.s32 1, %s31
      %s41 = scalar_select %p38, %s40, %s31
      %p42 = scmp.ge.s32.totalorder %s41, 2
      %s43 = scalar_select %p42, 0, %s41
      %s44 = ssub.s32 %s31, %s43
      %s45 = ssub.s32 %s32, %s39
      %s46 = sor.u32 %s44, %s45
      %p47 = scmp.eq.s32.totalorder %s46, 0
      %s49 = sadd.s32 %s48, 1
      %s50 = scalar_select %p47, %s48, %s49
      %p53 = pneg %p47
      %p54 = scmp.eq.s32.totalorder %s24, 1
      %p55 = por %p53, %p54
      %p56 = scmp.ne.s32.totalorder %s48, %s51
      %p57 = scmp.eq.s32.totalorder %s24, 0
      %p58 = por %p56, %p57
      %p59 = scmp.ne.s32.totalorder %s48, %s51
      %p60 = scmp.eq.s32.totalorder %s29, 1
      %p61 = por %p59, %p60
      %p62 = scmp.ne.s32.totalorder %s51, %s52
      %p63 = scmp.eq.s32.totalorder %s29, 0
      %p64 = por %p62, %p63
      %p65 = scmp.ne.s32.totalorder %s51, %s52
      %p66 = scmp.eq.s32.totalorder %s30, 1
      %p67 = por %p65, %p66
      %p69 = scmp.ne.s32.totalorder %s52, %s68
      %p70 = scmp.eq.s32.totalorder %s30, 0
      %p71 = por %p69, %p70
      %s72 = ssub.s32 %s31, %s43
      %s73 = ssub.s32 %s32, %s39
      %s74 = sor.u32 %s72, %s73
      %p75 = scmp.eq.s32.totalorder %s74, 0
      %s77 = sadd.s32 %s76, 1
      %s78 = scalar_select %p75, %s76, %s77
      %p81 = pneg %p75
      %p82 = scmp.eq.s32.totalorder %s24, 1
      %p83 = por %p81, %p82
      %p84 = scmp.ne.s32.totalorder %s76, %s79
      %p85 = scmp.eq.s32.totalorder %s24, 0
      %p86 = por %p84, %p85
      %p87 = scmp.ne.s32.totalorder %s76, %s79
      %p88 = scmp.eq.s32.totalorder %s29, 1
      %p89 = por %p87, %p88
      %p90 = scmp.ne.s32.totalorder %s79, %s80
      %p91 = scmp.eq.s32.totalorder %s29, 0
      %p92 = por %p90, %p91
      %p93 = scmp.ne.s32.totalorder %s79, %s80
      %p94 = scmp.eq.s32.totalorder %s30, 1
      %p95 = por %p93, %p94
      %p97 = scmp.ne.s32.totalorder %s80, %s96
      %p98 = scmp.eq.s32.totalorder %s30, 0
      %p99 = por %p97, %p98
      %s101 = sadd.s32 %s100, 1
      %p104 = scmp.eq.s32.totalorder %s24, 1
      %p105 = scmp.ne.s32.totalorder %s100, %s102
      %p106 = scmp.eq.s32.totalorder %s24, 0
      %p107 = por %p105, %p106
      %p108 = scmp.ne.s32.totalorder %s100, %s102
      %p109 = scmp.eq.s32.totalorder %s29, 1
      %p110 = por %p108, %p109
      %p111 = scmp.ne.s32.totalorder %s102, %s103
      %p112 = scmp.eq.s32.totalorder %s29, 0
      %p113 = por %p111, %p112
      %p114 = scmp.ne.s32.totalorder %s102, %s103
      %p115 = scmp.eq.s32.totalorder %s30, 1
      %p116 = por %p114, %p115
      %p118 = scmp.ne.s32.totalorder %s103, %s117
      %p119 = scmp.eq.s32.totalorder %s30, 0
      %p120 = por %p118, %p119
      %s122 = sadd.s32 %s121, 1
      %p125 = scmp.eq.s32.totalorder %s24, 1
      %p126 = scmp.ne.s32.totalorder %s121, %s123
      %p127 = scmp.eq.s32.totalorder %s24, 0
      %p128 = por %p126, %p127
      %p129 = scmp.ne.s32.totalorder %s121, %s123
      %p130 = scmp.eq.s32.totalorder %s29, 1
      %p131 = por %p129, %p130
      %p132 = scmp.ne.s32.totalorder %s123, %s124
      %p133 = scmp.eq.s32.totalorder %s29, 0
      %p134 = por %p132, %p133
      %p135 = scmp.ne.s32.totalorder %s123, %s124
      %p136 = scmp.eq.s32.totalorder %s30, 1
      %p137 = por %p135, %p136
      %p139 = scmp.ne.s32.totalorder %s124, %s138
      %p140 = scmp.eq.s32.totalorder %s30, 0
      %p141 = por %p139, %p140
      %s143 = sadd.s32 %s142, 1
      %p146 = scmp.eq.s32.totalorder %s24, 1
      %p147 = scmp.ne.s32.totalorder %s142, %s144
      %p148 = scmp.eq.s32.totalorder %s24, 0
      %p149 = por %p147, %p148
      %p150 = scmp.ne.s32.totalorder %s142, %s144
      %p151 = scmp.eq.s32.totalorder %s29, 1
      %p152 = por %p150, %p151
      %p153 = scmp.ne.s32.totalorder %s144, %s145
      %p154 = scmp.eq.s32.totalorder %s29, 0
      %p155 = por %p153, %p154
      %p156 = scmp.ne.s32.totalorder %s144, %s145
      %p157 = scmp.eq.s32.totalorder %s30, 1
      %p158 = por %p156, %p157
      %p160 = scmp.ne.s32.totalorder %s145, %s159
      %p161 = scmp.eq.s32.totalorder %s30, 0
      %p162 = por %p160, %p161
      %s164 = sadd.s32 %s163, 1
      %p167 = scmp.eq.s32.totalorder %s24, 1
      %p168 = scmp.ne.s32.totalorder %s163, %s165
      %p169 = scmp.eq.s32.totalorder %s24, 0
      %p170 = por %p168, %p169
      %p171 = scmp.ne.s32.totalorder %s163, %s165
      %p172 = scmp.eq.s32.totalorder %s29, 1
      %p173 = por %p171, %p172
      %p174 = scmp.ne.s32.totalorder %s165, %s166
      %p175 = scmp.eq.s32.totalorder %s29, 0
      %p176 = por %p174, %p175
      %p177 = scmp.ne.s32.totalorder %s165, %s166
      %p178 = scmp.eq.s32.totalorder %s30, 1
      %p179 = por %p177, %p178
      %p181 = scmp.ne.s32.totalorder %s166, %s180
      %p182 = scmp.eq.s32.totalorder %s30, 0
      %p183 = por %p181, %p182
      %s185 = sadd.s32 %s184, 1
      %p188 = scmp.eq.s32.totalorder %s24, 1
      %p189 = scmp.ne.s32.totalorder %s184, %s186
      %p190 = scmp.eq.s32.totalorder %s24, 0
      %p191 = por %p189, %p190
      %p192 = scmp.ne.s32.totalorder %s184, %s186
      %p193 = scmp.eq.s32.totalorder %s29, 1
      %p194 = por %p192, %p193
      %p195 = scmp.ne.s32.totalorder %s186, %s187
      %p196 = scmp.eq.s32.totalorder %s29, 0
      %p197 = por %p195, %p196
      %p198 = scmp.ne.s32.totalorder %s186, %s187
      %p199 = scmp.eq.s32.totalorder %s30, 1
      %p200 = por %p198, %p199
      %p202 = scmp.ne.s32.totalorder %s187, %s201
      %p203 = scmp.eq.s32.totalorder %s30, 0
      %p204 = por %p202, %p203
      %s205 = ssub.s32 %s31, %s43
      %s206 = ssub.s32 %s32, %s39
      %s207 = sor.u32 %s205, %s206
      %p208 = scmp.eq.s32.totalorder %s207, 0
      %s210 = sadd.s32 %s209, 1
      %s211 = scalar_select %p208, %s209, %s210
      %p214 = pneg %p208
      %p215 = scmp.eq.s32.totalorder %s24, 1
      %p216 = por %p214, %p215
      %p217 = scmp.ne.s32.totalorder %s209, %s212
      %p218 = scmp.eq.s32.totalorder %s24, 0
      %p219 = por %p217, %p218
      %p220 = scmp.ne.s32.totalorder %s209, %s212
      %p221 = scmp.eq.s32.totalorder %s29, 1
      %p222 = por %p220, %p221
      %p223 = scmp.ne.s32.totalorder %s212, %s213
      %p224 = scmp.eq.s32.totalorder %s29, 0
      %p225 = por %p223, %p224
      %p226 = scmp.ne.s32.totalorder %s212, %s213
      %p227 = scmp.eq.s32.totalorder %s30, 1
      %p228 = por %p226, %p227
      %p230 = scmp.ne.s32.totalorder %s213, %s229
      %p231 = scmp.eq.s32.totalorder %s30, 0
      %p232 = por %p230, %p231
      %p233 = scmp.le.s32.totalorder 1, %s24
      %p234 = scmp.lt.s32.totalorder %s24, 3
      %p235 = pnand %p233, %p234
      %p236 = pneg %p235
      // Predicated region
      $region9: #{tpu_custom_call.1} parent=5 // pred_check
        _
      $region10: #{tpu_custom_call.1} parent=5 // pred_check_branch
        %238 = sbr.rel (%p235) target = $region12
      $region11: #{tpu_custom_call.1} parent=5 // pred_region
        %s239 = ssub.s32 %s24, 1
        // Predicated region
        $region13: #{tpu_custom_call.1} parent=11 // pred_check
          %p240 = pneg %p113
        $region14: #{tpu_custom_call.1} parent=11 // pred_check_branch
          %242 = sbr.rel (%p240) target = $region16
        $region15: #{tpu_custom_call.1} parent=11 // pred_region
          _
        $region16: #{tpu_custom_call.1} parent=11 // pred_fallthru
          _
        // Predicated region
        $region17: #{tpu_custom_call.1} parent=11 // pred_check
          %p243 = pneg %p134
        $region18: #{tpu_custom_call.1} parent=11 // pred_check_branch
          %245 = sbr.rel (%p243) target = $region20
        $region19: #{tpu_custom_call.1} parent=11 // pred_region
          _
        $region20: #{tpu_custom_call.1} parent=11 // pred_fallthru
          _
        // Predicated region
        $region21: #{tpu_custom_call.1} parent=11 // pred_check
          %p246 = pneg %p155
        $region22: #{tpu_custom_call.1} parent=11 // pred_check_branch
          %248 = sbr.rel (%p246) target = $region24
        $region23: #{tpu_custom_call.1} parent=11 // pred_region
          _
        $region24: #{tpu_custom_call.1} parent=11 // pred_fallthru
          _
        // Predicated region
        $region25: #{tpu_custom_call.1} parent=11 // pred_check
          %p249 = pneg %p176
        $region26: #{tpu_custom_call.1} parent=11 // pred_check_branch
          %251 = sbr.rel (%p249) target = $region28
        $region27: #{tpu_custom_call.1} parent=11 // pred_region
          _
        $region28: #{tpu_custom_call.1} parent=11 // pred_fallthru
          _
        // Predicated region
        $region29: #{tpu_custom_call.1} parent=11 // pred_check
          %p252 = pneg %p197
        $region30: #{tpu_custom_call.1} parent=11 // pred_check_branch
          %254 = sbr.rel (%p252) target = $region32
        $region31: #{tpu_custom_call.1} parent=11 // pred_region
          _
        $region32: #{tpu_custom_call.1} parent=11 // pred_fallthru
          _
      $region12: #{tpu_custom_call.1} parent=5 // pred_fallthru
        _
      %p255 = scmp.lt.s32.totalorder %s24, 2
      // Predicated region
      $region33: #{tpu_custom_call.1} parent=5 // pred_check
        %p256 = pneg %p255
      $region34: #{tpu_custom_call.1} parent=5 // pred_check_branch
        %258 = sbr.rel (%p256) target = $region36
      $region35: #{tpu_custom_call.1} parent=5 // pred_region
        // Predicated region
        $region37: #{tpu_custom_call.1} parent=35 // pred_check
          %p259 = pneg %p58
        $region38: #{tpu_custom_call.1} parent=35 // pred_check_branch
          %261 = sbr.rel (%p259) target = $region40
        $region39: #{tpu_custom_call.1} parent=35 // pred_region
          %s262 = sand.u32 %s48, 1
          %s263 = scalar_lea.sflag [#allocation4], %s262
          %s264 = sand.u32 %s48, 1
          %s265 = smul.addr %s264, 16
          %s266 = scalar_lea.vmem [#allocation3], %s265
          %s267 = smul.u32 2, %s32
          %269 = vsyncadd %s263, 0
          %s270 = smul.addr %s31, 2
          %s271 = sadd.s32 %s267, %s270
          %s272 = smul.addr %s271, 8
          %s273 = scalar_lea.hbm %s0, %s272
          %s275 = sshll.u32 %s273, 4
          %s276 = int_to_ptr.hbm [resolvable:$true] %s275
          %s277 = sshll.u32 %s266, 4
          %s278 = int_to_ptr.vmem [resolvable:$true] %s277
          %280 = dma.hbm_to_vmem [thread:$0]  %s276, 256, %s278, %s263
        $region40: #{tpu_custom_call.1} parent=35 // pred_fallthru
          _
        // Predicated region
        $region41: #{tpu_custom_call.1} parent=35 // pred_check
          %p281 = pneg %p86
        $region42: #{tpu_custom_call.1} parent=35 // pred_check_branch
          %283 = sbr.rel (%p281) target = $region44
        $region43: #{tpu_custom_call.1} parent=35 // pred_region
          %s284 = sand.u32 %s76, 1
          %s285 = scalar_lea.sflag [#allocation7], %s284
          %s286 = sand.u32 %s76, 1
          %s287 = smul.addr %s286, 32
          %s288 = scalar_lea.vmem [#allocation6], %s287
          %s289 = smul.u32 2, %s32
          %291 = vsyncadd %s285, 0
          %s292 = smul.addr %s31, 4
          %s293 = sadd.s32 %s289, %s292
          %s294 = smul.addr %s293, 8
          %s295 = scalar_lea.hbm %s1, %s294
          %s296 = sshll.u32 %s295, 4
          %s297 = int_to_ptr.hbm [resolvable:$true] %s296
          %s298 = sshll.u32 %s288, 4
          %s299 = int_to_ptr.vmem [resolvable:$true] %s298
          %304 = dma.hbm_to_vmem [thread:$0]  %s297, 512, %s299, %s285, 256, 256, 16
        $region44: #{tpu_custom_call.1} parent=35 // pred_fallthru
          _
      $region36: #{tpu_custom_call.1} parent=5 // pred_fallthru
        _
      %p305 = scmp.le.s32.totalorder 1, %s24
      %p306 = scmp.lt.s32.totalorder %s24, 3
      %p307 = pnand %p305, %p306
      %p308 = pneg %p307
      // Predicated region
      $region45: #{tpu_custom_call.1} parent=5 // pred_check
        _
      $region46: #{tpu_custom_call.1} parent=5 // pred_check_branch
        %310 = sbr.rel (%p307) target = $region48
      $region47: #{tpu_custom_call.1} parent=5 // pred_region
        %s311 = ssub.s32 %s24, 1
        %s312 = sand.u32 %s51, 1
        %s313 = scalar_lea.sflag [#allocation4], %s312
        %s314 = sand.u32 %s51, 1
        %s315 = smul.addr %s314, 16
        %s316 = scalar_lea.vmem [#allocation3], %s315
        // Predicated region
        $region49: #{tpu_custom_call.1} parent=47 // pred_check
          %p317 = pneg %p64
        $region50: #{tpu_custom_call.1} parent=47 // pred_check_branch
          %319 = sbr.rel (%p317) target = $region52
        $region51: #{tpu_custom_call.1} parent=47 // pred_region
          %321 = dma.done %s313, 256
        $region52: #{tpu_custom_call.1} parent=47 // pred_fallthru
          _
        %s322 = sand.u32 %s79, 1
        %s323 = scalar_lea.sflag [#allocation7], %s322
        %s324 = sand.u32 %s79, 1
        %s325 = smul.addr %s324, 32
        %s326 = scalar_lea.vmem [#allocation6], %s325
        // Predicated region
        $region53: #{tpu_custom_call.1} parent=47 // pred_check
          %p327 = pneg %p92
        $region54: #{tpu_custom_call.1} parent=47 // pred_check_branch
          %329 = sbr.rel (%p327) target = $region56
        $region55: #{tpu_custom_call.1} parent=47 // pred_region
          %331 = dma.done %s323, 512
        $region56: #{tpu_custom_call.1} parent=47 // pred_fallthru
          _
        %s332 = sand.u32 %s51, 1
        %s333 = scalar_lea.sflag [#allocation4], %s332
        %s334 = sand.u32 %s51, 1
        %s335 = smul.addr %s334, 16
        %s336 = scalar_lea.vmem [#allocation3], %s335
        %p337 = pneg %p64
        %p338 = pneg %p61
        %s339 = sand.u32 %s79, 1
        %s340 = scalar_lea.sflag [#allocation7], %s339
        %s341 = sand.u32 %s79, 1
        %s342 = smul.addr %s341, 32
        %s343 = scalar_lea.vmem [#allocation6], %s342
        %p344 = pneg %p92
        %p345 = pneg %p89
        %p346 = pneg %p113
        %p347 = pneg %p110
        %p348 = pneg %p134
        %p349 = pneg %p131
        %p350 = pneg %p155
        %p351 = pneg %p152
        %p352 = pneg %p176
        %p353 = pneg %p173
        %p354 = pneg %p197
        %p355 = pneg %p194
        %p356 = pneg %p225
        %p357 = pneg %p222
        %s358 = sand.u32 %s212, 1
        %s359 = scalar_lea.sflag [#allocation5], %s358
        %s360 = sand.u32 %s212, 1
        %s361 = smul.addr %s360, 16
        %s362 = scalar_lea.vmem [#allocation8], %s361
        %s363 = smul.u32 2, %s34
        %s364 = smul.u32 2, %s34
        %s365 = smul.u32 2, %s34
        %v367 = vld [vmem:[%s316] sm:$0xff]
        %v368 = vld [vmem:[%s316 + $0x8] sm:$0xff]
        %v369 = vld [vmem:[%s2] sm:$0xf]
        %v370 = vld [vmem:[%s326] sm:$0xff]
        %v371 = vld [vmem:[%s326 + $0x8] sm:$0xff]
        %v372 = vld [vmem:[%s326 + $0x10] sm:$0xff]
        %v373 = vld [vmem:[%s326 + $0x18] sm:$0xff]
        %v374 = vpack.c.bf16 %v372, %v370
        %v375 = vpack.c.bf16 %v373, %v371
        %v376 = vld [vmem:[%s3] sm:$0xf]
        %v377 = vpack.c.bf16 %v367, %v367
        %v378 = vpack.c.bf16 %v368, %v368
        %vm379 = vcmask 64512
        %v381 = vsel %vm379, %v376, 0
        %vm383 = vcmask 1043456
        %v385 = vsel %vm383, %v377, 0
        %v388 = vsel %vm383, %v378, 0
        %390 = vmatpush.bf16.msra.mxu0 0
        %391 = vmatpush.bf16.msra.mxu0 0
        %392 = vmatpush.bf16.msra.mxu0 0
        %393 = vmatpush.bf16.msra.mxu0 0
        %394 = vmatpush.bf16.msra.mxu0 0
        %395 = vmatpush.bf16.msra.mxu0 0
        %396 = vmatpush.bf16.msra.mxu0 0
        %397 = vmatpush.bf16.msra.mxu0 %v385
        %398 = vmatmul.bf16.gmra.mxu0 %v381
        %v399 = vpop.f32.mrf.mxu0
        %v400 = vadd.f32 0.0, %v399
        %v401 = vpop.f32.mrf.mxu0
        %402 = vdwg.mxu0
        %403 = vmatpush.bf16.msra.mxu0 0
        %404 = vmatpush.bf16.msra.mxu0 0
        %405 = vmatpush.bf16.msra.mxu0 0
        %406 = vmatpush.bf16.msra.mxu0 0
        %407 = vmatpush.bf16.msra.mxu0 0
        %408 = vmatpush.bf16.msra.mxu0 0
        %409 = vmatpush.bf16.msra.mxu0 0
        %410 = vmatpush.bf16.msra.mxu0 %v388
        %411 = vmatmul.bf16.gmra.mxu0 %v381
        %v412 = vpop.f32.mrf.mxu0
        %v413 = vadd.f32 0.0, %v412
        %v414 = vpop.f32.mrf.mxu0
        %415 = vdwg.mxu0
        %vm416 = vcmask 130048
        %v418 = vsel %vm416, %v369, 0
        %420 = vmatpush.bf16.msra.mxu0 0
        %421 = vmatpush.bf16.msra.mxu0 0
        %422 = vmatpush.bf16.msra.mxu0 0
        %423 = vmatpush.bf16.msra.mxu0 0
        %424 = vmatpush.bf16.msra.mxu0 0
        %425 = vmatpush.bf16.msra.mxu0 0
        %426 = vmatpush.bf16.msra.mxu0 0
        %427 = vmatpush.bf16.msra.mxu0 %v374
        %428 = vmatmul.bf16.gmra.mxu0 %v418
        %v429 = vpop.f32.mrf.mxu0
        %v430 = vadd.f32 %v400, %v429
        %v431 = vpop.f32.mrf.mxu0
        %432 = vdwg.mxu0
        %433 = vmatpush.bf16.msra.mxu0 0
        %434 = vmatpush.bf16.msra.mxu0 0
        %435 = vmatpush.bf16.msra.mxu0 0
        %436 = vmatpush.bf16.msra.mxu0 0
        %437 = vmatpush.bf16.msra.mxu0 0
        %438 = vmatpush.bf16.msra.mxu0 0
        %439 = vmatpush.bf16.msra.mxu0 0
        %440 = vmatpush.bf16.msra.mxu0 %v375
        %441 = vmatmul.bf16.gmra.mxu0 %v418
        %v442 = vpop.f32.mrf.mxu0
        %v443 = vadd.f32 %v413, %v442
        %v444 = vpop.f32.mrf.mxu0
        %445 = vdwg.mxu0
        %v446 = vld [vmem:[%s4] sm:$0xff]
        %448 = vset.pattern.permute.xlu0 0
        %449 = vperm.xlu0 %448, %v446
        %v450 = vpop.permute.xlu0 %449
        %v452 = vadd.f32 %v430, %v450
        %v453 = vadd.f32 %v443, %v450
        %v454 = vmax.f32 %v452, 0.0
        %v455 = vmax.f32 %v453, 0.0
        %v456 = vld [vmem:[%s5] sm:$0xff]
        %458 = vset.pattern.permute.xlu0 0
        %459 = vperm.xlu0 %458, %v456
        %v460 = vpop.permute.xlu0 %459
        %v462 = vmul.f32 %v454, %v460
        %v463 = vmul.f32 %v455, %v460
        %v464 = vrot.slane %v462, 4
        %v465 = vadd.f32 %v462, %v464
        %v466 = vrot.slane %v465, 2
        %v467 = vadd.f32 %v465, %v466
        %v468 = vrot.slane %v467, 1
        %v469 = vadd.f32 %v467, %v468
        %v470 = vrot.slane %v463, 4
        %v471 = vadd.f32 %v463, %v470
        %v472 = vrot.slane %v471, 2
        %v473 = vadd.f32 %v471, %v472
        %v474 = vrot.slane %v473, 1
        %v475 = vadd.f32 %v473, %v474
        %v476 = vld [vmem:[#allocation2] sm:$0x1]
        %478 = vset.pattern.permute.xlu0 0
        %479 = vperm.xlu0 %478, %v476
        %v480 = vpop.permute.xlu0 %479
        %v482 = vperm.slane %v480, 0
        %v483 = vadd.f32 %v469, %v482
        %v484 = vadd.f32 %v475, %v482
        %v485 = vxor.u32 %v483, 2147483648
        %v486 = vxor.u32 %v484, 2147483648
        %v487 = vmul.f32 %v485, 1.442695
        %v488 = vpow.pop %v487
        %v489 = vmul.f32 %v486, 1.442695
        %v490 = vpow.pop %v489
        %v491 = vadd.f32 %v488, 1.0
        %v492 = vadd.f32 %v490, 1.0
        %v493 = vrcp.pop %v491
        %v494 = vmul.f32 %v491, %v493
        %v495 = vsub.f32 1.0, %v494
        %v496 = vmul.f32 %v493, %v495
        %v497 = vadd.f32 %v493, %v496
        %vm498 = vweird.f32 %v491
        %vm499 = vweird.f32 %v493
        %vm500 = vmor %vm498, %vm499
        %v501 = vsel %vm500, %v493, %v497
        %v502 = vand.u32 2147483647, %v491
        %vm503 = vcmp.eq.f32.partialorder %v502, 8.507059e+37
        %v504 = vand.u32 %v491, 2147483648
        %v505 = vor.u32 1.1754944e-38, %v504
        %v506 = vsel %vm503, %v505, %v501
        %v507 = vmul.f32 1.0, %v506
        %v508 = vrcp.pop %v492
        %v509 = vmul.f32 %v492, %v508
        %v510 = vsub.f32 1.0, %v509
        %v511 = vmul.f32 %v508, %v510
        %v512 = vadd.f32 %v508, %v511
        %vm513 = vweird.f32 %v492
        %vm514 = vweird.f32 %v508
        %vm515 = vmor %vm513, %vm514
        %v516 = vsel %vm515, %v508, %v512
        %v517 = vand.u32 2147483647, %v492
        %vm518 = vcmp.eq.f32.partialorder %v517, 8.507059e+37
        %v519 = vand.u32 %v492, 2147483648
        %v520 = vor.u32 1.1754944e-38, %v519
        %v521 = vsel %vm518, %v520, %v516
        %v522 = vmul.f32 1.0, %v521
        %v523 = vmul.f32 %v367, %v507
        %v524 = vmul.f32 %v368, %v522
        %525 = vst [vmem:[%s362] sm:$0xff] %v523
        %526 = vst [vmem:[%s362 + $0x8] sm:$0xff] %v524
        %s527 = sand.u32 %s212, 1
        %s528 = scalar_lea.sflag [#allocation5], %s527
        %s529 = sand.u32 %s212, 1
        %s530 = smul.addr %s529, 16
        %s531 = scalar_lea.vmem [#allocation8], %s530
        // Predicated region
        $region57: #{tpu_custom_call.1} parent=47 // pred_check
          %p532 = pneg %p222
        $region58: #{tpu_custom_call.1} parent=47 // pred_check_branch
          %534 = sbr.rel (%p532) target = $region60
        $region59: #{tpu_custom_call.1} parent=47 // pred_region
          %s535 = smul.u32 2, %s34
          %537 = vsyncadd %s528, 0
          %s538 = smul.addr %s33, 2
          %s539 = sadd.s32 %s535, %s538
          %s540 = smul.addr %s539, 8
          %s541 = scalar_lea.hbm %s7, %s540
          %s543 = sshll.u32 %s531, 4
          %s544 = int_to_ptr.vmem [resolvable:$true] %s543
          %s545 = sshll.u32 %s541, 4
          %s546 = int_to_ptr.hbm [resolvable:$true] %s545
          %548 = dma.vmem_to_hbm [thread:$0]  %s544, 256, %s546, %s528
        $region60: #{tpu_custom_call.1} parent=47 // pred_fallthru
          _
      $region48: #{tpu_custom_call.1} parent=5 // pred_fallthru
        _
      %p549 = scmp.le.s32.totalorder 2, %s24
      // Predicated region
      $region61: #{tpu_custom_call.1} parent=5 // pred_check
        %p550 = pneg %p549
      $region62: #{tpu_custom_call.1} parent=5 // pred_check_branch
        %552 = sbr.rel (%p550) target = $region64
      $region63: #{tpu_custom_call.1} parent=5 // pred_region
        %s553 = ssub.s32 %s24, 2
        // Predicated region
        $region65: #{tpu_custom_call.1} parent=63 // pred_check
          %p554 = pneg %p228
        $region66: #{tpu_custom_call.1} parent=63 // pred_check_branch
          %556 = sbr.rel (%p554) target = $region68
        $region67: #{tpu_custom_call.1} parent=63 // pred_region
          %s557 = sand.u32 %s213, 1
          %s558 = scalar_lea.sflag [#allocation5], %s557
          %s559 = sand.u32 %s213, 1
          %s560 = smul.addr %s559, 16
          %s561 = scalar_lea.vmem [#allocation8], %s560
          %563 = dma.done %s558, 256
        $region68: #{tpu_custom_call.1} parent=63 // pred_fallthru
          _
      $region64: #{tpu_custom_call.1} parent=5 // pred_fallthru
        _
    $region6: #{tpu_custom_call.1} parent=1 // loop_footer
      %s28 = sadd.s32 1, %s24
    $region7: #{tpu_custom_call.1} parent=1 // loop_footer_branch
      %23 = sbr.rel target = $region3
    $region8: #{tpu_custom_call.1} parent=1 // loop_exit
      _
    %564 = vsyncpa [#allocation4], 1
    %s565 = scalar_lea.sflag [#allocation4], 1
    %566 = vsyncpa %s565, 1
    %567 = vsyncpa [#allocation7], 1
    %s568 = scalar_lea.sflag [#allocation7], 1
    %569 = vsyncpa %s568, 1
    %570 = vsyncpa [#allocation5], 1
    %s571 = scalar_lea.sflag [#allocation5], 1
    %572 = vsyncpa %s571, 1

</llo_original>
